<compile_context>
chip_gen: v6e
topology: v6e:2x2x1
jax: 0.10.0
libtpu: 0.0.40
codegen_flags: <defaults>
</compile_context>

<pallas_src>
import functools

import jax
import jax.numpy as jnp
from jax import lax
from jax.experimental import pallas as pl
from jax.experimental.pallas import tpu as pltpu


def _channel_attention_kernel(x_ref, w1_ref, w2_ref, out_ref, acc_ref, *,
                              bt, hw, t_hw, ragged):
    # x_ref : (Bt, C, T_HW)   w1_ref : (C, Hid)   w2_ref : (Hid, C)
    # out_ref : (Bt, C)       acc_ref : (2*Bt, C) f32  [0:Bt]=running max,
    #                                                  [Bt:2Bt]=running sum
    s = pl.program_id(1)
    n_s = pl.num_programs(1)
    c = acc_ref.shape[1]
    inv_hw = 1.0 / float(hw)

    @pl.when(s == 0)
    def _init():
        acc_ref[0:bt, :] = jnp.full((bt, c), -jnp.inf, jnp.float32)
        acc_ref[bt:2 * bt, :] = jnp.zeros((bt, c), jnp.float32)

    def _accumulate(mask_tail):
        x = x_ref[...]  # native dtype, no full-tile f32 cast
        if mask_tail:
            # Only the last spatial tile has an invalid (padded) tail; mask it.
            col = lax.broadcasted_iota(jnp.int32, (1, 1, t_hw), 2)
            valid = col < (hw - s * t_hw)
            x_max_in = jnp.where(valid, x, -jnp.inf)
            x_sum_in = jnp.where(valid, x, 0)
        else:
            x_max_in = x
            x_sum_in = x
        # XLU reductions over the lane (spatial) axis; sum accumulates in f32.
        tile_max = jnp.max(x_max_in, axis=-1).astype(jnp.float32)       # (Bt, C)
        tile_sum = jnp.sum(x_sum_in, axis=-1, dtype=jnp.float32)        # (Bt, C)
        acc_ref[0:bt, :] = jnp.maximum(acc_ref[0:bt, :], tile_max)
        acc_ref[bt:2 * bt, :] = acc_ref[bt:2 * bt, :] + tile_sum

    if ragged:
        # Unmasked fast path for every full tile; masked path only on the tail.
        @pl.when(s < n_s - 1)
        def _steady():
            _accumulate(False)

        @pl.when(s == n_s - 1)
        def _tail():
            _accumulate(True)
    else:
        _accumulate(False)

    @pl.when(s == n_s - 1)
    def _epilogue():
        # Deferred mean normalization (single scale instead of per-tile).
        acc_ref[bt:2 * bt, :] = acc_ref[bt:2 * bt, :] * inv_hw
        # Fused shared MLP over the stacked [max ; mean] rows -> one MXU pass.
        p = acc_ref[...]                                     # (2*Bt, C) f32
        w1 = w1_ref[...].astype(jnp.float32)                 # (C, Hid)
        w2 = w2_ref[...].astype(jnp.float32)                 # (Hid, C)
        h = jnp.maximum(jnp.dot(p, w1, preferred_element_type=jnp.float32), 0.0)
        o = jnp.dot(h, w2, preferred_element_type=jnp.float32)  # (2*Bt, C)
        out = o[0:bt, :] + o[bt:2 * bt, :]
        out_ref[...] = jax.nn.sigmoid(out).astype(out_ref.dtype)


def _vmem_capacity_bytes():
    try:
        return int(pltpu.get_tpu_info().vmem_capacity_bytes)
    except Exception:
        return 128 * 1024 * 1024  # conservative v5e/v6e assumption


def channel_attention(x, w1, w2, *, spatial_tile=None, vmem_limit_bytes=None):
    """x: (B, C, H, W); w1: (Hid, C) = Linear1.weight; w2: (C, Hid) = Linear2.weight."""
    B, C, H, W = x.shape
    hid, c_in = w1.shape
    assert c_in == C and w2.shape == (C, hid) and hid >= 1
    assert jnp.issubdtype(x.dtype, jnp.floating), "max-pool masking needs a float dtype"
    hw = H * W
    itemsize = jnp.dtype(x.dtype).itemsize

    # ---- generation-aware VMEM budgets -------------------------------------
    vmem_cap = _vmem_capacity_bytes()
    big_vmem = vmem_cap >= 96 * 1024 * 1024          # v5e / v6e (128 MiB)
    if vmem_limit_bytes is None:
        vmem_limit_bytes = (80 if big_vmem else 44) * 1024 * 1024
    per_buf_cap = (14 if big_vmem else 12) * 1024 * 1024   # per in-flight x buffer

    w_bytes = 2 * (w1.size * jnp.dtype(w1.dtype).itemsize +
                   w2.size * jnp.dtype(w2.dtype).itemsize)
    slack = 2 * 1024 * 1024

    def derive_t_hw(bt_):
        acc_bytes = 2 * bt_ * C * 4
        out_bytes = 2 * bt_ * C * itemsize
        avail = vmem_limit_bytes - w_bytes - acc_bytes - out_bytes - slack
        budget = min(max(avail // 2, 0), per_buf_cap)   # two in-flight x buffers
        per_lane = max(bt_ * C * itemsize, 1)
        t = min(budget // per_lane, 2048)               # 512-2048 is the sweet spot
        return max((t // 128) * 128, 128)

    # ---- batch tiling --------------------------------------------------------
    # bt=8 keeps sublane alignment and maximizes the spatial tile.  For a ragged
    # batch: small B uses bt=B (full-extent block, no wasted reads); large ragged
    # B is padded to a multiple of 8 so the tile never exceeds the VMEM budget.
    if B % 8 == 0:
        bt, pad_b = 8, 0
    else:
        t_full = spatial_tile if spatial_tile is not None else derive_t_hw(B)
        if B < 8 or t_full >= min(512, hw):
            bt, pad_b = B, 0
        else:
            pad_b = (-B) % 8
            bt = 8
    b_total = B + pad_b

    # ---- spatial tiling ------------------------------------------------------
    t_hw = spatial_tile if spatial_tile is not None else derive_t_hw(bt)
    if hw <= t_hw:
        t_hw = hw  # single full-extent block (legal even if not a 128 multiple)
    n_s = pl.cdiv(hw, t_hw)
    ragged = (hw % t_hw) != 0

    xr = x.reshape(B, C, hw)
    if pad_b:
        xr = jnp.pad(xr, ((0, pad_b), (0, 0), (0, 0)))
    w1t = jnp.transpose(w1)  # (C, Hid)
    w2t = jnp.transpose(w2)  # (Hid, C)

    kernel = functools.partial(_channel_attention_kernel,
                               bt=bt, hw=hw, t_hw=t_hw, ragged=ragged)

    flops = 2 * b_total * C * hw + 8 * b_total * C * hid
    bytes_accessed = (xr.size * itemsize
                      + w1.size * jnp.dtype(w1.dtype).itemsize
                      + w2.size * jnp.dtype(w2.dtype).itemsize
                      + b_total * C * itemsize)

    out = pl.pallas_call(
        kernel,
        out_shape=jax.ShapeDtypeStruct((b_total, C), x.dtype),
        grid_spec=pltpu.PrefetchScalarGridSpec(
            num_scalar_prefetch=0,
            grid=(b_total // bt, n_s),
            in_specs=[
                pl.BlockSpec((bt, C, t_hw), lambda b, s: (b, 0, s)),
                pl.BlockSpec((C, hid), lambda b, s: (0, 0)),   # resident weights
                pl.BlockSpec((hid, C), lambda b, s: (0, 0)),   # resident weights
            ],
            out_specs=pl.BlockSpec((bt, C), lambda b, s: (b, 0)),
            scratch_shapes=[pltpu.VMEM((2 * bt, C), jnp.float32)],
        ),
        compiler_params=pltpu.CompilerParams(
            dimension_semantics=("parallel", "arbitrary"),
            vmem_limit_bytes=vmem_limit_bytes,
        ),
        cost_estimate=pl.CostEstimate(
            flops=flops, transcendentals=b_total * C,
            bytes_accessed=bytes_accessed),
    )(xr, w1t, w2t)

    return out[:B].reshape(B, C, 1, 1)


def channel_attention_ref(x, w1, w2):
    """Pure-JAX reference mirroring the PyTorch forward."""
    B, C, H, W = x.shape
    xf = x.reshape(B, C, -1).astype(jnp.float32)
    maxp = jnp.max(xf, axis=-1)
    avgp = jnp.mean(xf, axis=-1)
    w1f = w1.astype(jnp.float32)
    w2f = w2.astype(jnp.float32)

    def mlp(p):
        return jnp.maximum(p @ w1f.T, 0.0) @ w2f.T

    out = jax.nn.sigmoid(mlp(maxp) + mlp(avgp))
    return out.reshape(B, C, 1, 1).astype(x.dtype)


if __name__ == "__main__":
    def _run_case(B, C, H, W, reduction_ratio, spatial_tile=None):
        hid = C // reduction_ratio
        key = jax.random.PRNGKey(0)
        kx, k1, k2 = jax.random.split(jax.random.fold_in(key, B * C + H), 3)
        x = jax.random.normal(kx, (B, C, H, W), dtype=jnp.float32)
        # nn.Linear weight shapes: (out_features, in_features), bias=False.
        w1 = jax.random.normal(k1, (hid, C), dtype=jnp.float32) * (1.0 / jnp.sqrt(C))
        w2 = jax.random.normal(k2, (C, hid), dtype=jnp.float32) * (1.0 / jnp.sqrt(hid))

        attn = jax.block_until_ready(
            channel_attention(x, w1, w2, spatial_tile=spatial_tile))
        ref = jax.block_until_ready(channel_attention_ref(x, w1, w2))

        assert attn.shape == (B, C, 1, 1), attn.shape
        assert attn.dtype == x.dtype, attn.dtype
        assert jnp.allclose(attn, ref, atol=1e-5, rtol=1e-5), "mismatch vs reference"

    # Primary small case consistent with the module (reduction_ratio=16 -> C >= 16).
    _run_case(B=2, C=32, H=16, W=16, reduction_ratio=16)
    # Streaming path: batch tiling (Bt=8) + multi-step ragged spatial reduction
    # (unmasked steady-state tiles, masked tail tile).
    _run_case(B=16, C=64, H=20, W=20, reduction_ratio=16, spatial_tile=128)
    # Ragged-batch padding path: B=10 > 8, not a multiple of 8, small forced tile.
    _run_case(B=10, C=32, H=32, W=32, reduction_ratio=16, spatial_tile=256)

    print("KERNEL_OK")
</pallas_src>

<mosaic_0001>
module attributes {stable_mosaic.version = 11 : i64} {
  func.func @_channel_attention_kernel(%arg0: i32, %arg1: i32, %arg2: memref<2x32x256xf32, #tpu.memory_space<vmem>>, %arg3: memref<32x2xf32, #tpu.memory_space<vmem>>, %arg4: memref<2x32xf32, #tpu.memory_space<vmem>>, %arg5: memref<2x32xf32, #tpu.memory_space<vmem>>, %arg6: memref<4x32xf32, #tpu.memory_space<vmem>>) attributes {dimension_semantics = [#tpu.dimension_semantics<parallel>, #tpu.dimension_semantics<arbitrary>], iteration_bounds = array<i64: 1, 1>, scalar_prefetch = 0 : i64, scratch_operands = 1 : i64, tpu.core_type = #tpu.core_type<tc>, window_params = [{transform_indices = @transform_0, window_bounds = array<i64: 2, 32, 256>}, {pipeline_mode = #tpu.pipeline_mode<synchronous>, transform_indices = @transform_1, window_bounds = array<i64: 32, 2>}, {pipeline_mode = #tpu.pipeline_mode<synchronous>, transform_indices = @transform_2, window_bounds = array<i64: 2, 32>}, {transform_indices = @transform_3, window_bounds = array<i64: 2, 32>}]} {
    %c0_i32 = arith.constant 0 : i32
    %0 = arith.cmpi eq, %arg1, %c0_i32 : i32
    %1 = arith.extui %0 : i1 to i32
    %c0_i32_0 = arith.constant 0 : i32
    %2 = arith.cmpi ne, %1, %c0_i32_0 : i32
    scf.if %2 {
      %cst_13 = arith.constant 0xFF800000 : f32
      %15 = vector.broadcast %cst_13 : f32 to vector<2x32xf32>
      %c0_14 = arith.constant 0 : index
      %c0_15 = arith.constant 0 : index
      %16 = vector.load %arg6[%c0_14, %c0_15] : memref<4x32xf32, #tpu.memory_space<vmem>>, vector<2x32xf32>
      tpu.vector_store %arg6[%c0_14, %c0_15], %15 {strides = array<i32>} : memref<4x32xf32, #tpu.memory_space<vmem>>, vector<2x32xf32>,
      %cst_16 = arith.constant 0.000000e+00 : f32
      %17 = vector.broadcast %cst_16 : f32 to vector<2x32xf32>
      %c2_17 = arith.constant 2 : index
      %c0_18 = arith.constant 0 : index
      %18 = vector.load %arg6[%c2_17, %c0_18] : memref<4x32xf32, #tpu.memory_space<vmem>>, vector<2x32xf32>
      tpu.vector_store %arg6[%c2_17, %c0_18], %17 {strides = array<i32>} : memref<4x32xf32, #tpu.memory_space<vmem>>, vector<2x32xf32>,
    } else {
    }
    %c0 = arith.constant 0 : index
    %c0_1 = arith.constant 0 : index
    %c0_2 = arith.constant 0 : index
    %3 = vector.load %arg2[%c0, %c0_1, %c0_2] : memref<2x32x256xf32, #tpu.memory_space<vmem>>, vector<2x32x256xf32>
    %cst = arith.constant dense<0xFF800000> : vector<2x32xf32>
    %4 = vector.multi_reduction <maximumf>, %3, %cst [2] : vector<2x32x256xf32> to vector<2x32xf32>
    %cst_3 = arith.constant dense<0.000000e+00> : vector<2x32xf32>
    %5 = vector.multi_reduction <add>, %3, %cst_3 [2] : vector<2x32x256xf32> to vector<2x32xf32>
    %c0_4 = arith.constant 0 : index
    %c0_5 = arith.constant 0 : index
    %6 = vector.load %arg6[%c0_4, %c0_5] : memref<4x32xf32, #tpu.memory_space<vmem>>, vector<2x32xf32>
    %7 = arith.maximumf %6, %4 : vector<2x32xf32>
    %c0_6 = arith.constant 0 : index
    %c0_7 = arith.constant 0 : index
    %8 = vector.load %arg6[%c0_6, %c0_7] : memref<4x32xf32, #tpu.memory_space<vmem>>, vector<2x32xf32>
    tpu.vector_store %arg6[%c0_6, %c0_7], %7 {strides = array<i32>} : memref<4x32xf32, #tpu.memory_space<vmem>>, vector<2x32xf32>,
    %c2 = arith.constant 2 : index
    %c0_8 = arith.constant 0 : index
    %9 = vector.load %arg6[%c2, %c0_8] : memref<4x32xf32, #tpu.memory_space<vmem>>, vector<2x32xf32>
    %10 = arith.addf %9, %5 : vector<2x32xf32>
    %c2_9 = arith.constant 2 : index
    %c0_10 = arith.constant 0 : index
    %11 = vector.load %arg6[%c2_9, %c0_10] : memref<4x32xf32, #tpu.memory_space<vmem>>, vector<2x32xf32>
    tpu.vector_store %arg6[%c2_9, %c0_10], %10 {strides = array<i32>} : memref<4x32xf32, #tpu.memory_space<vmem>>, vector<2x32xf32>,
    %c0_i32_11 = arith.constant 0 : i32
    %12 = arith.cmpi eq, %arg1, %c0_i32_11 : i32
    %13 = arith.extui %12 : i1 to i32
    %c0_i32_12 = arith.constant 0 : i32
    %14 = arith.cmpi ne, %13, %c0_i32_12 : i32
    scf.if %14 {
      %c2_13 = arith.constant 2 : index
      %c0_14 = arith.constant 0 : index
      %15 = vector.load %arg6[%c2_13, %c0_14] : memref<4x32xf32, #tpu.memory_space<vmem>>, vector<2x32xf32>
      %cst_15 = arith.constant 3.906250e-03 : f32
      %16 = vector.broadcast %cst_15 : f32 to vector<2x32xf32>
      %17 = arith.mulf %15, %16 : vector<2x32xf32>
      %c2_16 = arith.constant 2 : index
      %c0_17 = arith.constant 0 : index
      %18 = vector.load %arg6[%c2_16, %c0_17] : memref<4x32xf32, #tpu.memory_space<vmem>>, vector<2x32xf32>
      tpu.vector_store %arg6[%c2_16, %c0_17], %17 {strides = array<i32>} : memref<4x32xf32, #tpu.memory_space<vmem>>, vector<2x32xf32>,
      %c0_18 = arith.constant 0 : index
      %c0_19 = arith.constant 0 : index
      %19 = vector.load %arg6[%c0_18, %c0_19] : memref<4x32xf32, #tpu.memory_space<vmem>>, vector<4x32xf32>
      %c0_20 = arith.constant 0 : index
      %c0_21 = arith.constant 0 : index
      %20 = vector.load %arg3[%c0_20, %c0_21] : memref<32x2xf32, #tpu.memory_space<vmem>>, vector<32x2xf32>
      %c0_22 = arith.constant 0 : index
      %c0_23 = arith.constant 0 : index
      %21 = vector.load %arg4[%c0_22, %c0_23] : memref<2x32xf32, #tpu.memory_space<vmem>>, vector<2x32xf32>
      %cst_24 = arith.constant dense<0.000000e+00> : vector<4x2xf32>
      %22 = tpu.matmul %19, %20, %cst_24 {dimension_numbers = #tpu.dot_dimension_numbers<[1], [0], [0], [1], [0, 0, 1, 1], [], []>} : vector<4x32xf32>, vector<32x2xf32>, vector<4x2xf32> -> vector<4x2xf32>
      %cst_25 = arith.constant 0.000000e+00 : f32
      %23 = vector.broadcast %cst_25 : f32 to vector<4x2xf32>
      %24 = arith.maximumf %22, %23 : vector<4x2xf32>
      %cst_26 = arith.constant dense<0.000000e+00> : vector<4x32xf32>
      %25 = tpu.matmul %24, %21, %cst_26 {dimension_numbers = #tpu.dot_dimension_numbers<[1], [0], [0], [1], [0, 0, 1, 1], [], []>} : vector<4x2xf32>, vector<2x32xf32>, vector<4x32xf32> -> vector<4x32xf32>
      %26 = vector.extract_strided_slice %25 {offsets = [0, 0], sizes = [2, 32], strides = [1, 1]} : vector<4x32xf32> to vector<2x32xf32>
      %27 = vector.extract_strided_slice %25 {offsets = [2, 0], sizes = [2, 32], strides = [1, 1]} : vector<4x32xf32> to vector<2x32xf32>
      %28 = arith.addf %26, %27 : vector<2x32xf32>
      %29 = arith.negf %28 : vector<2x32xf32>
      %30 = math.exp %29 : vector<2x32xf32>
      %cst_27 = arith.constant 1.000000e+00 : f32
      %31 = vector.broadcast %cst_27 : f32 to vector<2x32xf32>
      %32 = arith.addf %31, %30 : vector<2x32xf32>
      %33 = arith.divf %31, %32 : vector<2x32xf32>
      %c0_28 = arith.constant 0 : index
      %c0_29 = arith.constant 0 : index
      %34 = vector.load %arg5[%c0_28, %c0_29] : memref<2x32xf32, #tpu.memory_space<vmem>>, vector<2x32xf32>
      tpu.vector_store %arg5[%c0_28, %c0_29], %33 {strides = array<i32>} : memref<2x32xf32, #tpu.memory_space<vmem>>, vector<2x32xf32>,
    } else {
    }
    return
  }
  func.func @transform_0(%arg0: i32, %arg1: i32) -> (i32, i32, i32) {
    %c0_i32 = arith.constant 0 : i32
    %c0_i32_0 = arith.constant 0 : i32
    return %arg0, %c0_i32, %arg1 : i32, i32, i32
  }
  func.func @transform_1(%arg0: i32, %arg1: i32) -> (i32, i32) {
    %c0_i32 = arith.constant 0 : i32
    %c0_i32_0 = arith.constant 0 : i32
    %c0_i32_1 = arith.constant 0 : i32
    return %c0_i32, %c0_i32_0 : i32, i32
  }
  func.func @transform_2(%arg0: i32, %arg1: i32) -> (i32, i32) {
    %c0_i32 = arith.constant 0 : i32
    %c0_i32_0 = arith.constant 0 : i32
    %c0_i32_1 = arith.constant 0 : i32
    return %c0_i32, %c0_i32_0 : i32, i32
  }
  func.func @transform_3(%arg0: i32, %arg1: i32) -> (i32, i32) {
    %c0_i32 = arith.constant 0 : i32
    %c0_i32_0 = arith.constant 0 : i32
    return %arg0, %c0_i32 : i32, i32
  }
}

</mosaic_0001>

<llo_original>
// kernel: tpu_custom_call.1
$region0: #{tpu_custom_call.1}
  #allocation0 [shape = 'u32[]', space=smem, size = 0x4, offset = 0x4, fixed_abs, tag = 'smem constant byte address 0x4 - core index']
  #allocation1 [shape = 'u32[144,128]{1,0:T(1,128)}', space=vmem, size = 0x12000, scoped, tag = 'internal scratch']
  #allocation2 [shape = 'f32[4,32]{1,0:T(4,128)}', space=vmem, size = 0x800, scoped, tag = 'scratch operand']
  %s0 = inlined_call_operand.hbm [shape: f32[2,32,256], index: 0, kind: input, shape index: {}]
  %s1 = inlined_call_operand.vmem [shape: f32[32,2], index: 1, kind: input, shape index: {}]
  %s2 = inlined_call_operand.vmem [shape: f32[2,32], index: 2, kind: input, shape index: {}]
  %s3 = inlined_call_operand.hbm [shape: f32[2,32], index: 3, kind: output, shape index: {}]
  %s4 = sld [smem:[#allocation0]]
  $region34: #{tpu_custom_call.1} parent=0
    _
  %s6 = ssub.s32 1, %s4
  %s7 = scalar_select 0, %s6, %s4
  $region1: #{tpu_custom_call.1} parent=0
    #allocation3 [shape = 'u8[65536]{0}', space=vmem, size = 0x10000, scoped, tag = 'input window, operand 0, single buffered']
    #allocation4 [shape = 's32[1]{0}', space=sflag, size = 0x4, scoped, tag = 'scoped memory for tpu_custom_call.1']
    #allocation5 [shape = 's32[1]{0}', space=sflag, size = 0x4, scoped, tag = 'scoped memory for tpu_custom_call.1']
    #allocation6 [shape = 'u8[1024]{0}', space=vmem, size = 0x400, scoped, tag = 'output window, operand 0, single buffered']
    %8 = vsyncpa [#allocation4], 0
    %9 = vsyncpa [#allocation5], 0
    // Predicated region
    $region2: #{tpu_custom_call.1} parent=1 // pred_check
      _
    $region3: #{tpu_custom_call.1} parent=1 // pred_check_branch
      %11 = sbr.rel (0) target = $region5
    $region4: #{tpu_custom_call.1} parent=1 // pred_region
      %s13 = ssub.s32 2048, 2048
      %14 = vsyncadd [#allocation4], %s13
      %s15 = sshll.u32 [#allocation3], 4
      %s16 = int_to_ptr.vmem [resolvable:$true] %s15
      %21 = dma.hbm_to_vmem [thread:$0]  %s0, 2048, %s16, [#allocation4], 256, 256, 16
    $region5: #{tpu_custom_call.1} parent=1 // pred_fallthru
      _
    // Predicated region
    $region6: #{tpu_custom_call.1} parent=1 // pred_check
      _
    $region7: #{tpu_custom_call.1} parent=1 // pred_check_branch
      %23 = sbr.rel (0) target = $region9
    $region8: #{tpu_custom_call.1} parent=1 // pred_region
      _
    $region9: #{tpu_custom_call.1} parent=1 // pred_fallthru
      _
    // Predicated region
    $region10: #{tpu_custom_call.1} parent=1 // pred_check
      _
    $region11: #{tpu_custom_call.1} parent=1 // pred_check_branch
      %25 = sbr.rel (0) target = $region13
    $region12: #{tpu_custom_call.1} parent=1 // pred_region
      _
    $region13: #{tpu_custom_call.1} parent=1 // pred_fallthru
      _
    // Predicated region
    $region14: #{tpu_custom_call.1} parent=1 // pred_check
      _
    $region15: #{tpu_custom_call.1} parent=1 // pred_check_branch
      %27 = sbr.rel (0) target = $region17
    $region16: #{tpu_custom_call.1} parent=1 // pred_region
      %28 = dma.done [#allocation4], 2048
    $region17: #{tpu_custom_call.1} parent=1 // pred_fallthru
      _
    %p29 = scmp.eq.s32.totalorder 0, 0
    // Predicated region
    $region18: #{tpu_custom_call.1} parent=1 // pred_check
      %p30 = pneg %p29
    $region19: #{tpu_custom_call.1} parent=1 // pred_check_branch
      %32 = sbr.rel (%p30) target = $region21
    $region20: #{tpu_custom_call.1} parent=1 // pred_region
      %vm33 = vcmask 254976
      %34 = vst.msk [vmem:[#allocation2] sm:$0x3] %vm33, -inf
      %35 = vst.msk [vmem:[#allocation2 + $0x2] sm:$0x3] %vm33, 0.0
    $region21: #{tpu_custom_call.1} parent=1 // pred_fallthru
      _
    %v36 = vld [vmem:[#allocation3] sm:$0xff]
    %v37 = vld [vmem:[#allocation3 + $0x8] sm:$0xff]
    %v38 = vld [vmem:[#allocation3 + $0x10] sm:$0xff]
    %v39 = vld [vmem:[#allocation3 + $0x18] sm:$0xff]
    %v40 = vld [vmem:[#allocation3 + $0x20] sm:$0xff]
    %v41 = vld [vmem:[#allocation3 + $0x28] sm:$0xff]
    %v42 = vld [vmem:[#allocation3 + $0x30] sm:$0xff]
    %v43 = vld [vmem:[#allocation3 + $0x38] sm:$0xff]
    %v44 = vld [vmem:[#allocation3 + $0x40] sm:$0xff]
    %v45 = vld [vmem:[#allocation3 + $0x48] sm:$0xff]
    %v46 = vld [vmem:[#allocation3 + $0x50] sm:$0xff]
    %v47 = vld [vmem:[#allocation3 + $0x58] sm:$0xff]
    %v48 = vld [vmem:[#allocation3 + $0x60] sm:$0xff]
    %v49 = vld [vmem:[#allocation3 + $0x68] sm:$0xff]
    %v50 = vld [vmem:[#allocation3 + $0x70] sm:$0xff]
    %v51 = vld [vmem:[#allocation3 + $0x78] sm:$0xff]
    %v52 = vmax.f32 %v36, %v37
    %53 = vmax.xlane.f32.xlu0 %v52
    %v54 = vpop.xlane.xlu0 %53
    %v55 = vmax.f32 %v38, %v39
    %56 = vmax.xlane.f32.xlu0 %v55
    %v57 = vpop.xlane.xlu0 %56
    %v58 = vmax.f32 %v40, %v41
    %59 = vmax.xlane.f32.xlu0 %v58
    %v60 = vpop.xlane.xlu0 %59
    %v61 = vmax.f32 %v42, %v43
    %62 = vmax.xlane.f32.xlu0 %v61
    %v63 = vpop.xlane.xlu0 %62
    %v64 = vmax.f32 %v44, %v45
    %65 = vmax.xlane.f32.xlu0 %v64
    %v66 = vpop.xlane.xlu0 %65
    %v67 = vmax.f32 %v46, %v47
    %68 = vmax.xlane.f32.xlu0 %v67
    %v69 = vpop.xlane.xlu0 %68
    %v70 = vmax.f32 %v48, %v49
    %71 = vmax.xlane.f32.xlu0 %v70
    %v72 = vpop.xlane.xlu0 %71
    %v73 = vmax.f32 %v50, %v51
    %74 = vmax.xlane.f32.xlu0 %v73
    %v75 = vpop.xlane.xlu0 %74
    %v76 = vadd.f32 %v36, %v37
    %77 = vadd.xlane.f32.xlu0 %v76
    %v78 = vpop.xlane.xlu0 %77
    %v79 = vadd.f32 %v38, %v39
    %80 = vadd.xlane.f32.xlu0 %v79
    %v81 = vpop.xlane.xlu0 %80
    %v82 = vadd.f32 %v40, %v41
    %83 = vadd.xlane.f32.xlu0 %v82
    %v84 = vpop.xlane.xlu0 %83
    %v85 = vadd.f32 %v42, %v43
    %86 = vadd.xlane.f32.xlu0 %v85
    %v87 = vpop.xlane.xlu0 %86
    %v88 = vadd.f32 %v44, %v45
    %89 = vadd.xlane.f32.xlu0 %v88
    %v90 = vpop.xlane.xlu0 %89
    %v91 = vadd.f32 %v46, %v47
    %92 = vadd.xlane.f32.xlu0 %v91
    %v93 = vpop.xlane.xlu0 %92
    %v94 = vadd.f32 %v48, %v49
    %95 = vadd.xlane.f32.xlu0 %v94
    %v96 = vpop.xlane.xlu0 %95
    %v97 = vadd.f32 %v50, %v51
    %98 = vadd.xlane.f32.xlu0 %v97
    %v99 = vpop.xlane.xlu0 %98
    %v100 = vld [vmem:[#allocation2] sm:$0x3]
    %v109 = vlaneseq
    %v110 = vand.u32 %v109, 127
    %v111 = vlaneseq
    %v112 = vshrl.u32 %v111, 7
    %v113 = vsub.s32 %v110, %v112
    %v114 = vrot.slane %v54, %v113
    %v115 = vadd.s32 %v110, 4294967288
    %v116 = vlaneseq
    %v117 = vshrl.u32 %v116, 7
    %v118 = vsub.s32 %v115, %v117
    %v119 = vrot.slane %v57, %v118
    %vm120 = vcmask 130112
    %v121 = vsel %vm120, %v119, %v114
    %v122 = vadd.s32 %v110, 4294967280
    %v123 = vlaneseq
    %v124 = vshrl.u32 %v123, 7
    %v125 = vsub.s32 %v122, %v124
    %v126 = vrot.slane %v60, %v125
    %vm127 = vcmask 195712
    %v128 = vsel %vm127, %v126, %v121
    %v129 = vadd.s32 %v110, 4294967272
    %v130 = vlaneseq
    %v131 = vshrl.u32 %v130, 7
    %v132 = vsub.s32 %v129, %v131
    %v133 = vrot.slane %v63, %v132
    %vm134 = vcmask 261312
    %v135 = vsel %vm134, %v133, %v128
    %v136 = vlaneseq
    %v137 = vshrl.u32 %v136, 7
    %v138 = vsub.s32 %v110, %v137
    %v139 = vrot.slane %v66, %v138
    %v140 = vlaneseq
    %v141 = vshrl.u32 %v140, 7
    %v142 = vsub.s32 %v115, %v141
    %v143 = vrot.slane %v69, %v142
    %v144 = vsel %vm120, %v143, %v139
    %v145 = vlaneseq
    %v146 = vshrl.u32 %v145, 7
    %v147 = vsub.s32 %v122, %v146
    %v148 = vrot.slane %v72, %v147
    %v149 = vsel %vm127, %v148, %v144
    %v150 = vlaneseq
    %v151 = vshrl.u32 %v150, 7
    %v152 = vsub.s32 %v129, %v151
    %v153 = vrot.slane %v75, %v152
    %v154 = vsel %vm134, %v153, %v149
    %vm155 = vcmask 1041409
    %v156 = vsel %vm155, %v154, %v135
    %v158 = vmax.f32 %v100, %v156
    %vm159 = vcmask 254976
    %160 = vst.msk [vmem:[#allocation2] sm:$0x3] %vm159, %v158
    %v161 = vld [vmem:[#allocation2 + $0x2] sm:$0x3]
    %v170 = vlaneseq
    %v171 = vshrl.u32 %v170, 7
    %v172 = vsub.s32 %v110, %v171
    %v173 = vrot.slane %v78, %v172
    %v174 = vlaneseq
    %v175 = vshrl.u32 %v174, 7
    %v176 = vsub.s32 %v115, %v175
    %v177 = vrot.slane %v81, %v176
    %v178 = vsel %vm120, %v177, %v173
    %v179 = vlaneseq
    %v180 = vshrl.u32 %v179, 7
    %v181 = vsub.s32 %v122, %v180
    %v182 = vrot.slane %v84, %v181
    %v183 = vsel %vm127, %v182, %v178
    %v184 = vlaneseq
    %v185 = vshrl.u32 %v184, 7
    %v186 = vsub.s32 %v129, %v185
    %v187 = vrot.slane %v87, %v186
    %v188 = vsel %vm134, %v187, %v183
    %v189 = vlaneseq
    %v190 = vshrl.u32 %v189, 7
    %v191 = vsub.s32 %v110, %v190
    %v192 = vrot.slane %v90, %v191
    %v193 = vlaneseq
    %v194 = vshrl.u32 %v193, 7
    %v195 = vsub.s32 %v115, %v194
    %v196 = vrot.slane %v93, %v195
    %v197 = vsel %vm120, %v196, %v192
    %v198 = vlaneseq
    %v199 = vshrl.u32 %v198, 7
    %v200 = vsub.s32 %v122, %v199
    %v201 = vrot.slane %v96, %v200
    %v202 = vsel %vm127, %v201, %v197
    %v203 = vlaneseq
    %v204 = vshrl.u32 %v203, 7
    %v205 = vsub.s32 %v129, %v204
    %v206 = vrot.slane %v99, %v205
    %v207 = vsel %vm134, %v206, %v202
    %v208 = vsel %vm155, %v207, %v188
    %v210 = vadd.f32 %v161, %v208
    %211 = vst.msk [vmem:[#allocation2 + $0x2] sm:$0x3] %vm159, %v210
    // Predicated region
    $region22: #{tpu_custom_call.1} parent=1 // pred_check
      %p212 = pneg %p29
    $region23: #{tpu_custom_call.1} parent=1 // pred_check_branch
      %214 = sbr.rel (%p212) target = $region25
    $region24: #{tpu_custom_call.1} parent=1 // pred_region
      %v215 = vld [vmem:[#allocation2 + $0x2] sm:$0x3]
      %v216 = vmul.f32 %v215, 0.00390625
      %217 = vst.msk [vmem:[#allocation2 + $0x2] sm:$0x3] %vm159, %v216
      %v218 = vld [vmem:[#allocation2] sm:$0xf]
      %v219 = vld [vmem:[%s1] sm:$0xff]
      %v220 = vld [vmem:[%s1 + $0x8] sm:$0xff]
      %v221 = vld [vmem:[%s1 + $0x10] sm:$0xff]
      %v222 = vld [vmem:[%s1 + $0x18] sm:$0xff]
      %v223 = vld [vmem:[%s2] sm:$0x3]
      %vm224 = vcmask 261120
      %v226 = vsel %vm224, %v218, 0
      %228 = vmatprep.subr.mxu0 0.0
      %229 = vmatpush1.msra.mxu0 0.0
      %230 = vmatprep.subr.mxu0 0.0
      %231 = vmatpush1.msra.mxu0 0.0
      %232 = vmatprep.subr.mxu0 0.0
      %233 = vmatpush1.msra.mxu0 0.0
      %234 = vmatprep.subr.mxu0 0.0
      %235 = vmatpush1.msra.mxu0 0.0
      %236 = vmatprep.subr.mxu0 0.0
      %237 = vmatpush1.msra.mxu0 0.0
      %238 = vmatprep.subr.mxu0 0.0
      %239 = vmatpush1.msra.mxu0 0.0
      %240 = vmatprep.subr.mxu0 0.0
      %241 = vmatpush1.msra.mxu0 0.0
      %242 = vmatprep.subr.mxu0 0.0
      %243 = vmatpush1.msra.mxu0 0.0
      %244 = vmatprep.subr.mxu0 0.0
      %245 = vmatpush1.msra.mxu0 0.0
      %246 = vmatprep.subr.mxu0 0.0
      %247 = vmatpush1.msra.mxu0 0.0
      %248 = vmatprep.subr.mxu0 0.0
      %249 = vmatpush1.msra.mxu0 0.0
      %250 = vmatprep.subr.mxu0 0.0
      %251 = vmatpush1.msra.mxu0 0.0
      %252 = vmatprep.subr.mxu0 0.0
      %253 = vmatpush1.msra.mxu0 %v222
      %254 = vmatprep.subr.mxu0 0.0
      %255 = vmatpush1.msra.mxu0 %v221
      %256 = vmatprep.subr.mxu0 0.0
      %257 = vmatpush1.msra.mxu0 %v220
      %258 = vmatprep.subr.mxu0 0.0
      %259 = vmatpush1.msra.mxu0 %v219
      %260 = vmatprep.subr.mxu0 0.0
      %261 = vmatpush2.msra.mxu0 0.0
      %262 = vmatprep.subr.mxu0 0.0
      %263 = vmatpush2.msra.mxu0 0.0
      %264 = vmatprep.subr.mxu0 0.0
      %265 = vmatpush2.msra.mxu0 0.0
      %266 = vmatprep.subr.mxu0 0.0
      %267 = vmatpush2.msra.mxu0 0.0
      %268 = vmatprep.subr.mxu0 0.0
      %269 = vmatpush2.msra.mxu0 0.0
      %270 = vmatprep.subr.mxu0 0.0
      %271 = vmatpush2.msra.mxu0 0.0
      %272 = vmatprep.subr.mxu0 0.0
      %273 = vmatpush2.msra.mxu0 0.0
      %274 = vmatprep.subr.mxu0 0.0
      %275 = vmatpush2.msra.mxu0 0.0
      %276 = vmatprep.subr.mxu0 0.0
      %277 = vmatpush2.msra.mxu0 0.0
      %278 = vmatprep.subr.mxu0 0.0
      %279 = vmatpush2.msra.mxu0 0.0
      %280 = vmatprep.subr.mxu0 0.0
      %281 = vmatpush2.msra.mxu0 0.0
      %282 = vmatprep.subr.mxu0 0.0
      %283 = vmatpush2.msra.mxu0 0.0
      %284 = vmatprep.subr.mxu0 0.0
      %285 = vmatpush2.msra.mxu0 0.0
      %286 = vmatprep.subr.mxu0 0.0
      %287 = vmatpush2.msra.mxu0 0.0
      %288 = vmatprep.subr.mxu0 0.0
      %289 = vmatpush2.msra.mxu0 0.0
      %290 = vmatprep.subr.mxu0 0.0
      %291 = vmatpush2.msra.mxu0 0.0
      %292 = vmatprep.mubr.f32.mxu0 0.0
      %293 = vmatmul.mubr.f32.gmra.mxu0 %v226
      %v294 = vpop.f32.mrf.mxu0
      %v295 = vadd.f32 0.0, %v294
      %v296 = vpop.f32.mrf.mxu0
      %297 = vdwg.mxu0
      %v298 = vmax.f32 %v295, 0.0
      %vm299 = vcmask 15360
      %v301 = vsel %vm299, %v298, 0
      %vm303 = vcmask 1041408
      %v305 = vsel %vm303, %v223, 0
      %307 = vmatprep.subr.mxu0 0.0
      %308 = vmatpush1.msra.mxu0 0.0
      %309 = vmatprep.subr.mxu0 0.0
      %310 = vmatpush1.msra.mxu0 0.0
      %311 = vmatprep.subr.mxu0 0.0
      %312 = vmatpush1.msra.mxu0 0.0
      %313 = vmatprep.subr.mxu0 0.0
      %314 = vmatpush1.msra.mxu0 0.0
      %315 = vmatprep.subr.mxu0 0.0
      %316 = vmatpush1.msra.mxu0 0.0
      %317 = vmatprep.subr.mxu0 0.0
      %318 = vmatpush1.msra.mxu0 0.0
      %319 = vmatprep.subr.mxu0 0.0
      %320 = vmatpush1.msra.mxu0 0.0
      %321 = vmatprep.subr.mxu0 0.0
      %322 = vmatpush1.msra.mxu0 0.0
      %323 = vmatprep.subr.mxu0 0.0
      %324 = vmatpush1.msra.mxu0 0.0
      %325 = vmatprep.subr.mxu0 0.0
      %326 = vmatpush1.msra.mxu0 0.0
      %327 = vmatprep.subr.mxu0 0.0
      %328 = vmatpush1.msra.mxu0 0.0
      %329 = vmatprep.subr.mxu0 0.0
      %330 = vmatpush1.msra.mxu0 0.0
      %331 = vmatprep.subr.mxu0 0.0
      %332 = vmatpush1.msra.mxu0 0.0
      %333 = vmatprep.subr.mxu0 0.0
      %334 = vmatpush1.msra.mxu0 0.0
      %335 = vmatprep.subr.mxu0 0.0
      %336 = vmatpush1.msra.mxu0 0.0
      %337 = vmatprep.subr.mxu0 0.0
      %338 = vmatpush1.msra.mxu0 %v305
      %339 = vmatprep.subr.mxu0 0.0
      %340 = vmatpush2.msra.mxu0 0.0
      %341 = vmatprep.subr.mxu0 0.0
      %342 = vmatpush2.msra.mxu0 0.0
      %343 = vmatprep.subr.mxu0 0.0
      %344 = vmatpush2.msra.mxu0 0.0
      %345 = vmatprep.subr.mxu0 0.0
      %346 = vmatpush2.msra.mxu0 0.0
      %347 = vmatprep.subr.mxu0 0.0
      %348 = vmatpush2.msra.mxu0 0.0
      %349 = vmatprep.subr.mxu0 0.0
      %350 = vmatpush2.msra.mxu0 0.0
      %351 = vmatprep.subr.mxu0 0.0
      %352 = vmatpush2.msra.mxu0 0.0
      %353 = vmatprep.subr.mxu0 0.0
      %354 = vmatpush2.msra.mxu0 0.0
      %355 = vmatprep.subr.mxu0 0.0
      %356 = vmatpush2.msra.mxu0 0.0
      %357 = vmatprep.subr.mxu0 0.0
      %358 = vmatpush2.msra.mxu0 0.0
      %359 = vmatprep.subr.mxu0 0.0
      %360 = vmatpush2.msra.mxu0 0.0
      %361 = vmatprep.subr.mxu0 0.0
      %362 = vmatpush2.msra.mxu0 0.0
      %363 = vmatprep.subr.mxu0 0.0
      %364 = vmatpush2.msra.mxu0 0.0
      %365 = vmatprep.subr.mxu0 0.0
      %366 = vmatpush2.msra.mxu0 0.0
      %367 = vmatprep.subr.mxu0 0.0
      %368 = vmatpush2.msra.mxu0 0.0
      %369 = vmatprep.subr.mxu0 0.0
      %370 = vmatpush2.msra.mxu0 0.0
      %371 = vmatprep.mubr.f32.mxu0 0.0
      %372 = vmatmul.mubr.f32.gmra.mxu0 %v301
      %v373 = vpop.f32.mrf.mxu0
      %v374 = vadd.f32 0.0, %v373
      %v375 = vpop.f32.mrf.mxu0
      %376 = vdwg.mxu0
      %v378 = vrot.slane %v374, 2
      %v380 = vadd.f32 %v374, %v378
      %v381 = vxor.u32 %v380, 2147483648
      %v382 = vmul.f32 %v381, 1.442695
      %v383 = vpow.pop %v382
      %v384 = vadd.f32 %v383, 1.0
      %v385 = vrcp.pop %v384
      %v386 = vmul.f32 1.0, %v385
      %387 = vst.msk [vmem:[#allocation6] sm:$0x3] %vm159, %v386
    $region25: #{tpu_custom_call.1} parent=1 // pred_fallthru
      _
    // Predicated region
    $region26: #{tpu_custom_call.1} parent=1 // pred_check
      _
    $region27: #{tpu_custom_call.1} parent=1 // pred_check_branch
      %389 = sbr.rel (0) target = $region29
    $region28: #{tpu_custom_call.1} parent=1 // pred_region
      %s391 = ssub.s32 32, 32
      %392 = vsyncadd [#allocation5], %s391
      %s394 = sshll.u32 [#allocation6], 4
      %s395 = int_to_ptr.vmem [resolvable:$true] %s394
      %397 = dma.vmem_to_hbm [thread:$0]  %s395, 32, %s3, [#allocation5]
    $region29: #{tpu_custom_call.1} parent=1 // pred_fallthru
      _
    // Predicated region
    $region30: #{tpu_custom_call.1} parent=1 // pred_check
      _
    $region31: #{tpu_custom_call.1} parent=1 // pred_check_branch
      %399 = sbr.rel (0) target = $region33
    $region32: #{tpu_custom_call.1} parent=1 // pred_region
      %400 = dma.done [#allocation5], 32
    $region33: #{tpu_custom_call.1} parent=1 // pred_fallthru
      _
    %401 = vsyncpa [#allocation4], 1
    %402 = vsyncpa [#allocation5], 1

</llo_original>
